<compile_context>
chip_gen: v7x
topology: tpu7x:2x2x1
jax: 0.10.0
libtpu: 0.0.40
codegen_flags: <defaults>
</compile_context>

<pallas_src>
import jax
import jax.numpy as jnp
from jax.experimental import pallas as pl
from jax.experimental.pallas import tpu as pltpu

LN_EPS = 1e-5


def _round_up(n, m):
    return (n + m - 1) // m * m


def _pick_tile_rows(rows, tile_rows):
    # Keep >= 2 grid steps when possible (v7x megacore + pipelining); rows
    # tile must be a multiple of 8 sublanes.
    return max(8, min(tile_rows, _round_up(pl.cdiv(rows, 2), 8)))


def _pick_tn(out_dim, tn_max=512):
    # Small projections: single N tile.  Large out_dim: prefer multiples of
    # 256 so both 256-wide MXU passes stay busy on v6e/v7x.
    if out_dim <= tn_max:
        return out_dim
    for tn in (tn_max, 384, 256, 128):
        if tn <= tn_max and out_dim % tn == 0:
            return tn
    return out_dim  # not 128-divisible -> must take the full dim in one block


def _vmem_limit_bytes(tile_rows, d, tn, x_dtype, out_dtype, wt_dtype):
    bx = jnp.dtype(x_dtype).itemsize
    bo = jnp.dtype(out_dtype).itemsize
    bw = jnp.dtype(wt_dtype).itemsize
    est = (2 * tile_rows * d * bx        # double-buffered x tiles
           + 2 * tile_rows * tn * bo     # double-buffered out tiles
           + 2 * d * tn * bw             # double-buffered W^T tiles
           + tile_rows * d * bw          # normalized-activation scratch
           + 8 * (d + tn) * 4)           # gamma/beta/bias (+ layout slack)
    est = int(est * 1.5)                 # headroom for compiler temporaries
    # Floor 16 MiB; cap 48 MiB so the same config is safe on v7x (64 MiB VMEM).
    return min(max(est, 16 * 1024 * 1024), 48 * 1024 * 1024)


# ----------------------------------------------------------------------------
# Fused kernel: LayerNorm(dim) -> Linear(dim, out_dim), one HBM pass over x.
# Grid: (row tiles "parallel", N tiles "arbitrary").
#   x tile (tile_rows, d) : block index (i, 0)  -> fetched once per row tile
#   W^T    (d, tn)        : block index (0, j)
#   out    (tile_rows, tn): block index (i, j)
# LayerNorm is computed once per row tile (j == 0) into VMEM scratch y_ref
# (in MXU operand dtype) and reused for every N tile.
# ----------------------------------------------------------------------------
def _prenorm_linear_kernel(x_ref, g_ref, b_ref, wt_ref, fb_ref, o_ref, y_ref):
    @pl.when(pl.program_id(1) == 0)
    def _():
        x = x_ref[...].astype(jnp.float32)               # LN stats in f32
        mean = jnp.mean(x, axis=-1, keepdims=True)       # single pass:
        mean_sq = jnp.mean(x * x, axis=-1, keepdims=True)
        var = jnp.maximum(mean_sq - mean * mean, 0.0)
        inv = jax.lax.rsqrt(var + LN_EPS)                # EUP rsqrt
        y = (x - mean) * inv * g_ref[...] + b_ref[...]
        y_ref[...] = y.astype(y_ref.dtype)               # MXU operand dtype

    acc = jnp.dot(y_ref[...], wt_ref[...],
                  preferred_element_type=jnp.float32)     # f32 accumulation
    o_ref[...] = (acc + fb_ref[...]).astype(o_ref.dtype)


def prepare_prenorm_linear_params(gamma, beta, weight, bias, *,
                                  mxu_dtype=jnp.bfloat16):
    """One-time prep (hoisted out of the per-call path): transpose + cast W,
    reshape/cast the small params to f32 rows."""
    d = gamma.shape[0]
    out_dim = weight.shape[0]
    wt = weight.T
    if mxu_dtype is not None:   # bf16 operands -> MXU fast path on v5e/v6e/v7x
        wt = wt.astype(mxu_dtype)
    return (gamma.reshape(1, d).astype(jnp.float32),
            beta.reshape(1, d).astype(jnp.float32),
            wt,
            bias.reshape(1, out_dim).astype(jnp.float32))


def prenorm_linear_pallas(x, gamma2d, beta2d, wt, bias2d, *,
                          tile_rows=512, tn=None):
    """Fused PreNorm(LayerNorm(dim)) + Linear(dim, out_dim) on (B, S, dim).

    Takes params pre-prepared by `prepare_prenorm_linear_params`."""
    b, s, d = x.shape
    out_dim = wt.shape[1]
    rows = b * s
    x2d = x.reshape(rows, d)

    tile_rows = _pick_tile_rows(rows, tile_rows)
    tn = _pick_tn(out_dim) if tn is None else tn
    grid = (pl.cdiv(rows, tile_rows), pl.cdiv(out_dim, tn))  # ragged tail OK

    out2d = pl.pallas_call(
        _prenorm_linear_kernel,
        out_shape=jax.ShapeDtypeStruct((rows, out_dim), x.dtype),
        grid_spec=pltpu.PrefetchScalarGridSpec(
            num_scalar_prefetch=0,
            grid=grid,
            in_specs=[
                pl.BlockSpec((tile_rows, d), lambda i, j: (i, 0)),   # x tile
                pl.BlockSpec((1, d), lambda i, j: (0, 0)),           # gamma
                pl.BlockSpec((1, d), lambda i, j: (0, 0)),           # beta
                pl.BlockSpec((d, tn), lambda i, j: (0, j)),          # W^T tile
                pl.BlockSpec((1, tn), lambda i, j: (0, j)),          # bias tile
            ],
            out_specs=pl.BlockSpec((tile_rows, tn), lambda i, j: (i, j)),
            scratch_shapes=[pltpu.VMEM((tile_rows, d), wt.dtype)],   # LN result
        ),
        compiler_params=pltpu.CompilerParams(
            # rows axis independent -> megacore-shardable on v7x (2 TCs);
            # N axis carries the LN scratch -> "arbitrary".
            dimension_semantics=("parallel", "arbitrary"),
            vmem_limit_bytes=_vmem_limit_bytes(tile_rows, d, tn,
                                               x.dtype, x.dtype, wt.dtype),
        ),
    )(x2d, gamma2d, beta2d, wt, bias2d)
    return out2d.reshape(b, s, out_dim)


def prenorm_linear(x, gamma, beta, weight, bias, *,
                   mxu_dtype=jnp.bfloat16, **kw):
    """Convenience wrapper (prefer preparing params once outside the hot loop)."""
    params = prepare_prenorm_linear_params(gamma, beta, weight, bias,
                                           mxu_dtype=mxu_dtype)
    return prenorm_linear_pallas(x, *params, **kw)


# ----------------------------------------------------------------------------
# Standalone LayerNorm kernel (generic PreNorm where fn is arbitrary).
# Prefer the fused path whenever fn is a projection: this path round-trips the
# normalized activation through HBM (pass out_dtype=jnp.bfloat16 to halve it).
# ----------------------------------------------------------------------------
def _layernorm_kernel(x_ref, g_ref, b_ref, o_ref):
    x = x_ref[...].astype(jnp.float32)
    mean = jnp.mean(x, axis=-1, keepdims=True)
    mean_sq = jnp.mean(x * x, axis=-1, keepdims=True)
    var = jnp.maximum(mean_sq - mean * mean, 0.0)
    inv = jax.lax.rsqrt(var + LN_EPS)
    o_ref[...] = ((x - mean) * inv * g_ref[...] + b_ref[...]).astype(o_ref.dtype)


def layernorm_pallas(x2d, gamma, beta, *, tile_rows=512, out_dtype=None):
    rows, d = x2d.shape
    tile_rows = _pick_tile_rows(rows, tile_rows)
    gamma2d = gamma.reshape(1, d).astype(jnp.float32)
    beta2d = beta.reshape(1, d).astype(jnp.float32)
    out_dtype = x2d.dtype if out_dtype is None else out_dtype
    return pl.pallas_call(
        _layernorm_kernel,
        out_shape=jax.ShapeDtypeStruct((rows, d), out_dtype),
        grid_spec=pltpu.PrefetchScalarGridSpec(
            num_scalar_prefetch=0,
            grid=(pl.cdiv(rows, tile_rows),),   # no padding; ragged tail OK
            in_specs=[
                pl.BlockSpec((tile_rows, d), lambda i: (i, 0)),
                pl.BlockSpec((1, d), lambda i: (0, 0)),
                pl.BlockSpec((1, d), lambda i: (0, 0)),
            ],
            out_specs=pl.BlockSpec((tile_rows, d), lambda i: (i, 0)),
        ),
        compiler_params=pltpu.CompilerParams(
            dimension_semantics=("parallel",),
            vmem_limit_bytes=min(max(6 * tile_rows * d * 4, 16 * 1024 * 1024),
                                 48 * 1024 * 1024),
        ),
    )(x2d, gamma2d, beta2d)


def pre_norm(x, gamma, beta, fn, **kwargs):
    """Generic PreNorm: out = fn(LayerNorm(x), **kwargs) for arbitrary JAX fn."""
    b, s, d = x.shape
    normed = layernorm_pallas(x.reshape(b * s, d), gamma, beta)
    return fn(normed, **kwargs).reshape(b, s, -1)


# ----------------------------------------------------------------------------
# pure-JAX references
# ----------------------------------------------------------------------------
def _ln_ref(x, gamma, beta):
    x = x.astype(jnp.float32)
    mean = jnp.mean(x, axis=-1, keepdims=True)
    var = jnp.mean((x - mean) ** 2, axis=-1, keepdims=True)
    return (x - mean) / jnp.sqrt(var + LN_EPS) * gamma + beta


def _prenorm_linear_ref(x, gamma, beta, weight, bias, mxu_dtype=None):
    y = _ln_ref(x, gamma, beta)
    wt = weight.T
    if mxu_dtype is not None:           # mimic bf16 MXU operands, f32 accum
        y = y.astype(mxu_dtype)
        wt = wt.astype(mxu_dtype)
    out = jnp.dot(y, wt, preferred_element_type=jnp.float32) + bias
    return out.astype(x.dtype)


if __name__ == "__main__":
    key = jax.random.PRNGKey(0)
    k_x, k_g, k_b, k_w, k_fb, k_x2 = jax.random.split(key, 6)

    # Lane-dense dim (128); rows = 512 -> two 256-row tiles (>= 2 grid steps).
    batch, seq, dim = 2, 256, 128
    x = jax.random.normal(k_x, (batch, seq, dim), dtype=jnp.float32)

    # LayerNorm params (perturbed from nn.LayerNorm init to exercise affine)
    gamma = 1.0 + 0.1 * jax.random.normal(k_g, (dim,), dtype=jnp.float32)
    beta = 0.1 * jax.random.normal(k_b, (dim,), dtype=jnp.float32)

    # the wrapped fn: Linear(dim, dim)
    weight = jax.random.normal(k_w, (dim, dim), dtype=jnp.float32) * 0.02
    bias = jax.random.normal(k_fb, (dim,), dtype=jnp.float32) * 0.02

    # --- fused fast path: LN + Linear, bf16 MXU operands (f32 accumulation) --
    params = prepare_prenorm_linear_params(gamma, beta, weight, bias,
                                           mxu_dtype=jnp.bfloat16)  # hoisted once
    out = jax.block_until_ready(prenorm_linear_pallas(x, *params, tile_rows=512))
    ref = _prenorm_linear_ref(x, gamma, beta, weight, bias, mxu_dtype=jnp.bfloat16)
    assert out.shape == (batch, seq, dim)
    assert jnp.allclose(out, ref, atol=2e-2, rtol=2e-2), "fused mismatch"

    # --- bf16 activations + ragged rows (rows % tile_rows != 0, no jnp.pad) --
    xb = jax.random.normal(k_x2, (batch, 100, dim), dtype=jnp.bfloat16)
    out_b = jax.block_until_ready(prenorm_linear_pallas(xb, *params))
    ref_b = _prenorm_linear_ref(xb, gamma, beta, weight, bias,
                                mxu_dtype=jnp.bfloat16)
    assert out_b.dtype == jnp.bfloat16 and out_b.shape == (batch, 100, dim)
    assert jnp.allclose(out_b.astype(jnp.float32), ref_b.astype(jnp.float32),
                        atol=3e-2, rtol=3e-2), "bf16/ragged mismatch"

    # --- generic path: standalone LN kernel + arbitrary fn -------------------
    fn = lambda y2d: y2d @ weight.T + bias
    out_gen = jax.block_until_ready(pre_norm(x, gamma, beta, fn))
    ref_gen = _prenorm_linear_ref(x, gamma, beta, weight, bias)
    assert jnp.allclose(out_gen, ref_gen, atol=1e-3, rtol=1e-3), "generic mismatch"

    print("KERNEL_OK")
</pallas_src>

<mosaic_0001>
module attributes {stable_mosaic.version = 11 : i64} {
  func.func @_prenorm_linear_kernel(%arg0: i32, %arg1: i32, %arg2: memref<256x128xf32, #tpu.memory_space<vmem>>, %arg3: memref<1x128xf32, #tpu.memory_space<vmem>>, %arg4: memref<1x128xf32, #tpu.memory_space<vmem>>, %arg5: memref<128x128xbf16, #tpu.memory_space<vmem>>, %arg6: memref<1x128xf32, #tpu.memory_space<vmem>>, %arg7: memref<256x128xf32, #tpu.memory_space<vmem>>, %arg8: memref<256x128xbf16, #tpu.memory_space<vmem>>) attributes {dimension_semantics = [#tpu.dimension_semantics<parallel>, #tpu.dimension_semantics<arbitrary>], iteration_bounds = array<i64: 2, 1>, scalar_prefetch = 0 : i64, scratch_operands = 1 : i64, tpu.core_type = #tpu.core_type<tc>, window_params = [{transform_indices = @transform_0, window_bounds = array<i64: 256, 128>}, {pipeline_mode = #tpu.pipeline_mode<synchronous>, transform_indices = @transform_1, window_bounds = array<i64: 1, 128>}, {pipeline_mode = #tpu.pipeline_mode<synchronous>, transform_indices = @transform_2, window_bounds = array<i64: 1, 128>}, {transform_indices = @transform_3, window_bounds = array<i64: 128, 128>}, {transform_indices = @transform_4, window_bounds = array<i64: 1, 128>}, {transform_indices = @transform_5, window_bounds = array<i64: 256, 128>}]} {
    %c0_i32 = arith.constant 0 : i32
    %0 = arith.cmpi eq, %arg1, %c0_i32 : i32
    %1 = arith.extui %0 : i1 to i32
    %c0_i32_0 = arith.constant 0 : i32
    %2 = arith.cmpi ne, %1, %c0_i32_0 : i32
    scf.if %2 {
      %c0_8 = arith.constant 0 : index
      %c0_9 = arith.constant 0 : index
      %10 = vector.load %arg2[%c0_8, %c0_9] : memref<256x128xf32, #tpu.memory_space<vmem>>, vector<256x128xf32>
      %cst_10 = arith.constant dense<0.000000e+00> : vector<256xf32>
      %11 = vector.multi_reduction <add>, %10, %cst_10 [1] : vector<256x128xf32> to vector<256xf32>
      %12 = vector.shape_cast %11 : vector<256xf32> to vector<256x1xf32>
      %cst_11 = arith.constant 1.280000e+02 : f32
      %13 = vector.broadcast %cst_11 : f32 to vector<256x1xf32>
      %14 = arith.divf %12, %13 : vector<256x1xf32>
      %15 = arith.mulf %10, %10 : vector<256x128xf32>
      %cst_12 = arith.constant dense<0.000000e+00> : vector<256xf32>
      %16 = vector.multi_reduction <add>, %15, %cst_12 [1] : vector<256x128xf32> to vector<256xf32>
      %17 = vector.shape_cast %16 : vector<256xf32> to vector<256x1xf32>
      %cst_13 = arith.constant 1.280000e+02 : f32
      %18 = vector.broadcast %cst_13 : f32 to vector<256x1xf32>
      %19 = arith.divf %17, %18 : vector<256x1xf32>
      %20 = arith.mulf %14, %14 : vector<256x1xf32>
      %21 = arith.subf %19, %20 : vector<256x1xf32>
      %cst_14 = arith.constant 0.000000e+00 : f32
      %22 = vector.broadcast %cst_14 : f32 to vector<256x1xf32>
      %23 = arith.maximumf %21, %22 : vector<256x1xf32>
      %cst_15 = arith.constant 9.99999974E-6 : f32
      %24 = vector.broadcast %cst_15 : f32 to vector<256x1xf32>
      %25 = arith.addf %23, %24 : vector<256x1xf32>
      %26 = math.rsqrt %25 : vector<256x1xf32>
      %27 = vector.broadcast %14 : vector<256x1xf32> to vector<256x128xf32>
      %28 = arith.subf %10, %27 : vector<256x128xf32>
      %29 = vector.broadcast %26 : vector<256x1xf32> to vector<256x128xf32>
      %30 = arith.mulf %28, %29 : vector<256x128xf32>
      %c0_16 = arith.constant 0 : index
      %c0_17 = arith.constant 0 : index
      %31 = vector.load %arg3[%c0_16, %c0_17] : memref<1x128xf32, #tpu.memory_space<vmem>>, vector<1x128xf32>
      %32 = vector.broadcast %31 : vector<1x128xf32> to vector<256x128xf32>
      %33 = arith.mulf %30, %32 : vector<256x128xf32>
      %c0_18 = arith.constant 0 : index
      %c0_19 = arith.constant 0 : index
      %34 = vector.load %arg4[%c0_18, %c0_19] : memref<1x128xf32, #tpu.memory_space<vmem>>, vector<1x128xf32>
      %35 = vector.broadcast %34 : vector<1x128xf32> to vector<256x128xf32>
      %36 = arith.addf %33, %35 : vector<256x128xf32>
      %37 = arith.truncf %36 : vector<256x128xf32> to vector<256x128xbf16>
      %c0_20 = arith.constant 0 : index
      %c0_21 = arith.constant 0 : index
      %38 = vector.load %arg8[%c0_20, %c0_21] : memref<256x128xbf16, #tpu.memory_space<vmem>>, vector<256x128xbf16>
      tpu.vector_store %arg8[%c0_20, %c0_21], %37 {strides = array<i32>} : memref<256x128xbf16, #tpu.memory_space<vmem>>, vector<256x128xbf16>,
    } else {
    }
    %c0 = arith.constant 0 : index
    %c0_1 = arith.constant 0 : index
    %3 = vector.load %arg8[%c0, %c0_1] : memref<256x128xbf16, #tpu.memory_space<vmem>>, vector<256x128xbf16>
    %c0_2 = arith.constant 0 : index
    %c0_3 = arith.constant 0 : index
    %4 = vector.load %arg5[%c0_2, %c0_3] : memref<128x128xbf16, #tpu.memory_space<vmem>>, vector<128x128xbf16>
    %cst = arith.constant dense<0.000000e+00> : vector<256x128xf32>
    %5 = tpu.matmul %3, %4, %cst {dimension_numbers = #tpu.dot_dimension_numbers<[1], [0], [0], [1], [0, 0, 1, 1], [], []>} : vector<256x128xbf16>, vector<128x128xbf16>, vector<256x128xf32> -> vector<256x128xf32>
    %c0_4 = arith.constant 0 : index
    %c0_5 = arith.constant 0 : index
    %6 = vector.load %arg6[%c0_4, %c0_5] : memref<1x128xf32, #tpu.memory_space<vmem>>, vector<1x128xf32>
    %7 = vector.broadcast %6 : vector<1x128xf32> to vector<256x128xf32>
    %8 = arith.addf %5, %7 : vector<256x128xf32>
    %c0_6 = arith.constant 0 : index
    %c0_7 = arith.constant 0 : index
    %9 = vector.load %arg7[%c0_6, %c0_7] : memref<256x128xf32, #tpu.memory_space<vmem>>, vector<256x128xf32>
    tpu.vector_store %arg7[%c0_6, %c0_7], %8 {strides = array<i32>} : memref<256x128xf32, #tpu.memory_space<vmem>>, vector<256x128xf32>,
    return
  }
  func.func @transform_0(%arg0: i32, %arg1: i32) -> (i32, i32) {
    %c0_i32 = arith.constant 0 : i32
    %c0_i32_0 = arith.constant 0 : i32
    return %arg0, %c0_i32 : i32, i32
  }
  func.func @transform_1(%arg0: i32, %arg1: i32) -> (i32, i32) {
    %c0_i32 = arith.constant 0 : i32
    %c0_i32_0 = arith.constant 0 : i32
    %c0_i32_1 = arith.constant 0 : i32
    return %c0_i32, %c0_i32_0 : i32, i32
  }
  func.func @transform_2(%arg0: i32, %arg1: i32) -> (i32, i32) {
    %c0_i32 = arith.constant 0 : i32
    %c0_i32_0 = arith.constant 0 : i32
    %c0_i32_1 = arith.constant 0 : i32
    return %c0_i32, %c0_i32_0 : i32, i32
  }
  func.func @transform_3(%arg0: i32, %arg1: i32) -> (i32, i32) {
    %c0_i32 = arith.constant 0 : i32
    %c0_i32_0 = arith.constant 0 : i32
    return %c0_i32, %arg1 : i32, i32
  }
  func.func @transform_4(%arg0: i32, %arg1: i32) -> (i32, i32) {
    %c0_i32 = arith.constant 0 : i32
    %c0_i32_0 = arith.constant 0 : i32
    return %c0_i32, %arg1 : i32, i32
  }
  func.func @transform_5(%arg0: i32, %arg1: i32) -> (i32, i32) {
    %c0_i32 = arith.constant 0 : i32
    return %arg0, %arg1 : i32, i32
  }
}

</mosaic_0001>

<llo_original>
// kernel: tpu_custom_call.1
$region0: #{tpu_custom_call.1}
  #allocation0 [shape = 'u32[]', space=smem, size = 0x4, offset = 0x4, fixed_abs, tag = 'smem constant byte address 0x4 - core index']
  #allocation1 [shape = 'u32[144,128]{1,0:T(1,128)}', space=vmem, size = 0x12000, scoped, tag = 'internal scratch']
  #allocation2 [shape = 'bf16[256,128]{1,0:T(16,128)(2,1)}', space=vmem, size = 0x10000, scoped, tag = 'scratch operand']
  %s0 = inlined_call_operand.hbm [shape: f32[512,128], index: 0, kind: input, shape index: {}]
  %s1 = inlined_call_operand.vmem [shape: f32[1,128], index: 1, kind: input, shape index: {}]
  %s2 = inlined_call_operand.vmem [shape: f32[1,128], index: 2, kind: input, shape index: {}]
  %s3 = inlined_call_operand.hbm [shape: bf16[128,128], index: 3, kind: input, shape index: {}]
  %s4 = inlined_call_operand.vmem [shape: f32[1,128], index: 4, kind: input, shape index: {}]
  %s5 = inlined_call_operand.hbm [shape: f32[512,128], index: 5, kind: output, shape index: {}]
  %s6 = sld [smem:[#allocation0]]
  $region65: #{tpu_custom_call.1} parent=0
    _
  %s8 = ssub.s32 1, %s6
  %s9 = scalar_select 0, %s8, %s6
  $region1: #{tpu_custom_call.1} parent=0
    #allocation3 [shape = 'u8[262144]{0}', space=vmem, size = 0x40000, scoped, tag = 'input window, operand 0']
    #allocation4 [shape = 's32[2]{0}', space=sflag, size = 0x8, scoped, tag = 'scoped memory for tpu_custom_call.1']
    #allocation5 [shape = 's32[2]{0}', space=sflag, size = 0x8, scoped, tag = 'scoped memory for tpu_custom_call.1']
    #allocation6 [shape = 'u8[32768]{0}', space=vmem, size = 0x8000, scoped, tag = 'input window, operand 3, single buffered']
    #allocation7 [shape = 's32[1]{0}', space=sflag, size = 0x4, scoped, tag = 'scoped memory for tpu_custom_call.1']
    #allocation8 [shape = 'u8[262144]{0}', space=vmem, size = 0x40000, scoped, tag = 'output window, operand 0']
    %10 = vsyncpa [#allocation4], 0
    %s11 = scalar_lea.sflag [#allocation4], 1
    %12 = vsyncpa %s11, 0
    %13 = vsyncpa [#allocation7], 0
    %14 = vsyncpa [#allocation5], 0
    %s15 = scalar_lea.sflag [#allocation5], 1
    %16 = vsyncpa %s15, 0
    loop: start=0, step=1, limit=4
    $region2: #{tpu_custom_call.1} parent=1 // loop_pre_header
      _
    $region3: #{tpu_custom_call.1} parent=1 // loop_header
      %s18 = sphi 0, %s22
      %p19 = scmp.ge.s32.totalorder %s18, 4
      %s25 = sphi 0, %s37
      %s26 = sphi 0, %s33
      %s27 = sphi 0, %s25
      %s28 = sphi 0, %s26
      %s29 = sphi 0, %s27
      %s30 = sphi 0, %s28
      %s40 = sphi 0, %s42
      %s43 = sphi 0, %s40
      %s44 = sphi 0, %s43
      %s60 = sphi 0, %s44
      %s64 = sphi 0, %s64
      %s66 = sphi 0, %s64
      %s67 = sphi 0, %s66
      %s81 = sphi 0, %s67
      %s85 = sphi 0, %s85
      %s87 = sphi 0, %s85
      %s88 = sphi 0, %s87
      %s102 = sphi 0, %s88
      %s108 = sphi 0, %s110
      %s111 = sphi 0, %s108
      %s112 = sphi 0, %s111
      %s128 = sphi 0, %s112
      %s134 = sphi 0, %s136
      %s137 = sphi 0, %s134
      %s138 = sphi 0, %s137
      %s154 = sphi 0, %s138
      %s162 = sphi 0, %s164
      %s165 = sphi 0, %s162
      %s166 = sphi 0, %s165
      %s182 = sphi 0, %s166
    $region4: #{tpu_custom_call.1} parent=1 // loop_header_branch
      %21 = sbr.rel (%p19) target = $region8
    $region5: #{tpu_custom_call.1} parent=1 // loop_body
      %s23 = ssub.s32 %s18, 1
      %s24 = ssub.s32 %s18, 2
      %s31 = sadd.s32 1, %s26
      %p32 = scmp.ge.s32.totalorder %s31, 1
      %s33 = scalar_select %p32, 0, %s31
      %s34 = sadd.s32 1, %s25
      %s35 = scalar_select %p32, %s34, %s25
      %p36 = scmp.ge.s32.totalorder %s35, 2
      %s37 = scalar_select %p36, 0, %s35
      %s38 = ssub.s32 %s25, %s37
      %p39 = scmp.eq.s32.totalorder %s38, 0
      %s41 = sadd.s32 %s40, 1
      %s42 = scalar_select %p39, %s40, %s41
      %p45 = pneg %p39
      %p46 = scmp.eq.s32.totalorder %s18, 1
      %p47 = por %p45, %p46
      %p48 = scmp.ne.s32.totalorder %s40, %s43
      %p49 = scmp.eq.s32.totalorder %s18, 0
      %p50 = por %p48, %p49
      %p51 = scmp.ne.s32.totalorder %s40, %s43
      %p52 = scmp.eq.s32.totalorder %s23, 1
      %p53 = por %p51, %p52
      %p54 = scmp.ne.s32.totalorder %s43, %s44
      %p55 = scmp.eq.s32.totalorder %s23, 0
      %p56 = por %p54, %p55
      %p57 = scmp.ne.s32.totalorder %s43, %s44
      %p58 = scmp.eq.s32.totalorder %s24, 1
      %p59 = por %p57, %p58
      %p61 = scmp.ne.s32.totalorder %s44, %s60
      %p62 = scmp.eq.s32.totalorder %s24, 0
      %p63 = por %p61, %p62
      %s65 = sadd.s32 %s64, 1
      %p68 = scmp.eq.s32.totalorder %s18, 1
      %p69 = scmp.ne.s32.totalorder %s64, %s66
      %p70 = scmp.eq.s32.totalorder %s18, 0
      %p71 = por %p69, %p70
      %p72 = scmp.ne.s32.totalorder %s64, %s66
      %p73 = scmp.eq.s32.totalorder %s23, 1
      %p74 = por %p72, %p73
      %p75 = scmp.ne.s32.totalorder %s66, %s67
      %p76 = scmp.eq.s32.totalorder %s23, 0
      %p77 = por %p75, %p76
      %p78 = scmp.ne.s32.totalorder %s66, %s67
      %p79 = scmp.eq.s32.totalorder %s24, 1
      %p80 = por %p78, %p79
      %p82 = scmp.ne.s32.totalorder %s67, %s81
      %p83 = scmp.eq.s32.totalorder %s24, 0
      %p84 = por %p82, %p83
      %s86 = sadd.s32 %s85, 1
      %p89 = scmp.eq.s32.totalorder %s18, 1
      %p90 = scmp.ne.s32.totalorder %s85, %s87
      %p91 = scmp.eq.s32.totalorder %s18, 0
      %p92 = por %p90, %p91
      %p93 = scmp.ne.s32.totalorder %s85, %s87
      %p94 = scmp.eq.s32.totalorder %s23, 1
      %p95 = por %p93, %p94
      %p96 = scmp.ne.s32.totalorder %s87, %s88
      %p97 = scmp.eq.s32.totalorder %s23, 0
      %p98 = por %p96, %p97
      %p99 = scmp.ne.s32.totalorder %s87, %s88
      %p100 = scmp.eq.s32.totalorder %s24, 1
      %p101 = por %p99, %p100
      %p103 = scmp.ne.s32.totalorder %s88, %s102
      %p104 = scmp.eq.s32.totalorder %s24, 0
      %p105 = por %p103, %p104
      %s106 = ssub.s32 %s26, %s33
      %p107 = scmp.eq.s32.totalorder %s106, 0
      %s109 = sadd.s32 %s108, 1
      %s110 = scalar_select %p107, %s108, %s109
      %p113 = pneg %p107
      %p114 = scmp.eq.s32.totalorder %s18, 1
      %p115 = por %p113, %p114
      %p116 = scmp.ne.s32.totalorder %s108, %s111
      %p117 = scmp.eq.s32.totalorder %s18, 0
      %p118 = por %p116, %p117
      %p119 = scmp.ne.s32.totalorder %s108, %s111
      %p120 = scmp.eq.s32.totalorder %s23, 1
      %p121 = por %p119, %p120
      %p122 = scmp.ne.s32.totalorder %s111, %s112
      %p123 = scmp.eq.s32.totalorder %s23, 0
      %p124 = por %p122, %p123
      %p125 = scmp.ne.s32.totalorder %s111, %s112
      %p126 = scmp.eq.s32.totalorder %s24, 1
      %p127 = por %p125, %p126
      %p129 = scmp.ne.s32.totalorder %s112, %s128
      %p130 = scmp.eq.s32.totalorder %s24, 0
      %p131 = por %p129, %p130
      %s132 = ssub.s32 %s26, %s33
      %p133 = scmp.eq.s32.totalorder %s132, 0
      %s135 = sadd.s32 %s134, 1
      %s136 = scalar_select %p133, %s134, %s135
      %p139 = pneg %p133
      %p140 = scmp.eq.s32.totalorder %s18, 1
      %p141 = por %p139, %p140
      %p142 = scmp.ne.s32.totalorder %s134, %s137
      %p143 = scmp.eq.s32.totalorder %s18, 0
      %p144 = por %p142, %p143
      %p145 = scmp.ne.s32.totalorder %s134, %s137
      %p146 = scmp.eq.s32.totalorder %s23, 1
      %p147 = por %p145, %p146
      %p148 = scmp.ne.s32.totalorder %s137, %s138
      %p149 = scmp.eq.s32.totalorder %s23, 0
      %p150 = por %p148, %p149
      %p151 = scmp.ne.s32.totalorder %s137, %s138
      %p152 = scmp.eq.s32.totalorder %s24, 1
      %p153 = por %p151, %p152
      %p155 = scmp.ne.s32.totalorder %s138, %s154
      %p156 = scmp.eq.s32.totalorder %s24, 0
      %p157 = por %p155, %p156
      %s158 = ssub.s32 %s25, %s37
      %s159 = ssub.s32 %s26, %s33
      %s160 = sor.u32 %s158, %s159
      %p161 = scmp.eq.s32.totalorder %s160, 0
      %s163 = sadd.s32 %s162, 1
      %s164 = scalar_select %p161, %s162, %s163
      %p167 = pneg %p161
      %p168 = scmp.eq.s32.totalorder %s18, 1
      %p169 = por %p167, %p168
      %p170 = scmp.ne.s32.totalorder %s162, %s165
      %p171 = scmp.eq.s32.totalorder %s18, 0
      %p172 = por %p170, %p171
      %p173 = scmp.ne.s32.totalorder %s162, %s165
      %p174 = scmp.eq.s32.totalorder %s23, 1
      %p175 = por %p173, %p174
      %p176 = scmp.ne.s32.totalorder %s165, %s166
      %p177 = scmp.eq.s32.totalorder %s23, 0
      %p178 = por %p176, %p177
      %p179 = scmp.ne.s32.totalorder %s165, %s166
      %p180 = scmp.eq.s32.totalorder %s24, 1
      %p181 = por %p179, %p180
      %p183 = scmp.ne.s32.totalorder %s166, %s182
      %p184 = scmp.eq.s32.totalorder %s24, 0
      %p185 = por %p183, %p184
      %p186 = scmp.le.s32.totalorder 1, %s18
      %p187 = scmp.lt.s32.totalorder %s18, 3
      %p188 = pnand %p186, %p187
      %p189 = pneg %p188
      // Predicated region
      $region9: #{tpu_custom_call.1} parent=5 // pred_check
        _
      $region10: #{tpu_custom_call.1} parent=5 // pred_check_branch
        %191 = sbr.rel (%p188) target = $region12
      $region11: #{tpu_custom_call.1} parent=5 // pred_region
        %s192 = ssub.s32 %s18, 1
        // Predicated region
        $region13: #{tpu_custom_call.1} parent=11 // pred_check
          %p193 = pneg %p77
        $region14: #{tpu_custom_call.1} parent=11 // pred_check_branch
          %195 = sbr.rel (%p193) target = $region16
        $region15: #{tpu_custom_call.1} parent=11 // pred_region
          _
        $region16: #{tpu_custom_call.1} parent=11 // pred_fallthru
          _
        // Predicated region
        $region17: #{tpu_custom_call.1} parent=11 // pred_check
          %p196 = pneg %p98
        $region18: #{tpu_custom_call.1} parent=11 // pred_check_branch
          %198 = sbr.rel (%p196) target = $region20
        $region19: #{tpu_custom_call.1} parent=11 // pred_region
          _
        $region20: #{tpu_custom_call.1} parent=11 // pred_fallthru
          _
        // Predicated region
        $region21: #{tpu_custom_call.1} parent=11 // pred_check
          %p199 = pneg %p124
        $region22: #{tpu_custom_call.1} parent=11 // pred_check_branch
          %201 = sbr.rel (%p199) target = $region24
        $region23: #{tpu_custom_call.1} parent=11 // pred_region
          %s203 = ssub.s32 1024, 1024
          %204 = vsyncadd [#allocation7], %s203
          %s205 = smul.addr %s28, 64
          %s206 = scalar_lea.hbm %s3, %s205
          %s207 = sshll.u32 [#allocation6], 4
          %s208 = int_to_ptr.vmem [resolvable:$true] %s207
          %213 = dma.hbm_to_vmem [thread:$0]  %s206, 1024, %s208, [#allocation7], 64, 64, 4
        $region24: #{tpu_custom_call.1} parent=11 // pred_fallthru
          _
        // Predicated region
        $region25: #{tpu_custom_call.1} parent=11 // pred_check
          %p214 = pneg %p150
        $region26: #{tpu_custom_call.1} parent=11 // pred_check_branch
          %216 = sbr.rel (%p214) target = $region28
        $region27: #{tpu_custom_call.1} parent=11 // pred_region
          %p217 = scmp.lt.s32.totalorder %s28, 0
          %s218 = scalar_select %p217, %s28, 0
          %s219 = scalar_lea.vmem %s4, %s218
        $region28: #{tpu_custom_call.1} parent=11 // pred_fallthru
          _
      $region12: #{tpu_custom_call.1} parent=5 // pred_fallthru
        _
      %p220 = scmp.lt.s32.totalorder %s18, 2
      // Predicated region
      $region29: #{tpu_custom_call.1} parent=5 // pred_check
        %p221 = pneg %p220
      $region30: #{tpu_custom_call.1} parent=5 // pred_check_branch
        %223 = sbr.rel (%p221) target = $region32
      $region31: #{tpu_custom_call.1} parent=5 // pred_region
        // Predicated region
        $region33: #{tpu_custom_call.1} parent=31 // pred_check
          %p224 = pneg %p50
        $region34: #{tpu_custom_call.1} parent=31 // pred_check_branch
          %226 = sbr.rel (%p224) target = $region36
        $region35: #{tpu_custom_call.1} parent=31 // pred_region
          %s227 = sand.u32 %s40, 1
          %s228 = scalar_lea.sflag [#allocation4], %s227
          %s229 = sand.u32 %s40, 1
          %s230 = smul.addr %s229, 256
          %s231 = scalar_lea.vmem [#allocation3], %s230
          %s232 = smul.u32 32, %s25
          %s234 = ssub.s32 4096, 4096
          %235 = vsyncadd %s228, %s234
          %s236 = smul.addr %s232, 128
          %s237 = scalar_lea.hbm %s0, %s236
          %s238 = sshll.u32 %s231, 4
          %s239 = int_to_ptr.vmem [resolvable:$true] %s238
          %244 = dma.hbm_to_vmem [thread:$0]  %s237, 4096, %s239, %s228, 128, 128, 8
        $region36: #{tpu_custom_call.1} parent=31 // pred_fallthru
          _
      $region32: #{tpu_custom_call.1} parent=5 // pred_fallthru
        _
      %p245 = scmp.le.s32.totalorder 1, %s18
      %p246 = scmp.lt.s32.totalorder %s18, 3
      %p247 = pnand %p245, %p246
      %p248 = pneg %p247
      // Predicated region
      $region37: #{tpu_custom_call.1} parent=5 // pred_check
        _
      $region38: #{tpu_custom_call.1} parent=5 // pred_check_branch
        %250 = sbr.rel (%p247) target = $region40
      $region39: #{tpu_custom_call.1} parent=5 // pred_region
        %s251 = ssub.s32 %s18, 1
        %s252 = sand.u32 %s43, 1
        %s253 = scalar_lea.sflag [#allocation4], %s252
        %s254 = sand.u32 %s43, 1
        %s255 = smul.addr %s254, 256
        %s256 = scalar_lea.vmem [#allocation3], %s255
        // Predicated region
        $region41: #{tpu_custom_call.1} parent=39 // pred_check
          %p257 = pneg %p56
        $region42: #{tpu_custom_call.1} parent=39 // pred_check_branch
          %259 = sbr.rel (%p257) target = $region44
        $region43: #{tpu_custom_call.1} parent=39 // pred_region
          %260 = dma.done %s253, 4096
        $region44: #{tpu_custom_call.1} parent=39 // pred_fallthru
          _
        // Predicated region
        $region45: #{tpu_custom_call.1} parent=39 // pred_check
          %p261 = pneg %p124
        $region46: #{tpu_custom_call.1} parent=39 // pred_check_branch
          %263 = sbr.rel (%p261) target = $region48
        $region47: #{tpu_custom_call.1} parent=39 // pred_region
          %264 = dma.done [#allocation7], 1024
        $region48: #{tpu_custom_call.1} parent=39 // pred_fallthru
          _
        %s265 = sand.u32 %s43, 1
        %s266 = scalar_lea.sflag [#allocation4], %s265
        %s267 = sand.u32 %s43, 1
        %s268 = smul.addr %s267, 256
        %s269 = scalar_lea.vmem [#allocation3], %s268
        %p270 = pneg %p56
        %p271 = pneg %p53
        %p272 = pneg %p77
        %p273 = pneg %p74
        %p274 = pneg %p98
        %p275 = pneg %p95
        %p276 = pneg %p124
        %p277 = pneg %p121
        %p278 = scmp.lt.s32.totalorder %s28, 0
        %s279 = scalar_select %p278, %s28, 0
        %s280 = scalar_lea.vmem %s4, %s279
        %p281 = pneg %p150
        %p282 = pneg %p147
        %p283 = pneg %p178
        %p284 = pneg %p175
        %s285 = sand.u32 %s165, 1
        %s286 = scalar_lea.sflag [#allocation5], %s285
        %s287 = sand.u32 %s165, 1
        %s288 = smul.addr %s287, 256
        %s289 = scalar_lea.vmem [#allocation8], %s288
        %s290 = smul.u32 32, %s27
        %p291 = scmp.lt.s32.totalorder %s28, 0
        %s292 = scalar_select %p291, %s28, 0
        %s293 = scalar_lea.vmem %s4, %s292
        %s294 = smul.u32 32, %s27
        %p296 = scmp.eq.s32.totalorder %s28, 0
        // Predicated region
        $region49: #{tpu_custom_call.1} parent=39 // pred_check
          %p297 = pneg %p296
        $region50: #{tpu_custom_call.1} parent=39 // pred_check_branch
          %299 = sbr.rel (%p297) target = $region52
        $region51: #{tpu_custom_call.1} parent=39 // pred_region
          %v300 = vld [vmem:[%s256] sm:$0xff]
          %v301 = vld [vmem:[%s256 + $0x8] sm:$0xff]
          %v302 = vld [vmem:[%s256 + $0x10] sm:$0xff]
          %v303 = vld [vmem:[%s256 + $0x18] sm:$0xff]
          %v304 = vld [vmem:[%s256 + $0x20] sm:$0xff]
          %v305 = vld [vmem:[%s256 + $0x28] sm:$0xff]
          %v306 = vld [vmem:[%s256 + $0x30] sm:$0xff]
          %v307 = vld [vmem:[%s256 + $0x38] sm:$0xff]
          %v308 = vld [vmem:[%s256 + $0x40] sm:$0xff]
          %v309 = vld [vmem:[%s256 + $0x48] sm:$0xff]
          %v310 = vld [vmem:[%s256 + $0x50] sm:$0xff]
          %v311 = vld [vmem:[%s256 + $0x58] sm:$0xff]
          %v312 = vld [vmem:[%s256 + $0x60] sm:$0xff]
          %v313 = vld [vmem:[%s256 + $0x68] sm:$0xff]
          %v314 = vld [vmem:[%s256 + $0x70] sm:$0xff]
          %v315 = vld [vmem:[%s256 + $0x78] sm:$0xff]
          %v316 = vld [vmem:[%s256 + $0x80] sm:$0xff]
          %v317 = vld [vmem:[%s256 + $0x88] sm:$0xff]
          %v318 = vld [vmem:[%s256 + $0x90] sm:$0xff]
          %v319 = vld [vmem:[%s256 + $0x98] sm:$0xff]
          %v320 = vld [vmem:[%s256 + $0xa0] sm:$0xff]
          %v321 = vld [vmem:[%s256 + $0xa8] sm:$0xff]
          %v322 = vld [vmem:[%s256 + $0xb0] sm:$0xff]
          %v323 = vld [vmem:[%s256 + $0xb8] sm:$0xff]
          %v324 = vld [vmem:[%s256 + $0xc0] sm:$0xff]
          %v325 = vld [vmem:[%s256 + $0xc8] sm:$0xff]
          %v326 = vld [vmem:[%s256 + $0xd0] sm:$0xff]
          %v327 = vld [vmem:[%s256 + $0xd8] sm:$0xff]
          %v328 = vld [vmem:[%s256 + $0xe0] sm:$0xff]
          %v329 = vld [vmem:[%s256 + $0xe8] sm:$0xff]
          %v330 = vld [vmem:[%s256 + $0xf0] sm:$0xff]
          %v331 = vld [vmem:[%s256 + $0xf8] sm:$0xff]
          %332 = vadd.xlane.f32.xlu0 %v300
          %v333 = vpop.xlane.xlu0 %332
          %334 = vadd.xlane.f32.xlu0 %v301
          %v335 = vpop.xlane.xlu0 %334
          %336 = vadd.xlane.f32.xlu0 %v302
          %v337 = vpop.xlane.xlu0 %336
          %338 = vadd.xlane.f32.xlu0 %v303
          %v339 = vpop.xlane.xlu0 %338
          %340 = vadd.xlane.f32.xlu0 %v304
          %v341 = vpop.xlane.xlu0 %340
          %342 = vadd.xlane.f32.xlu0 %v305
          %v343 = vpop.xlane.xlu0 %342
          %344 = vadd.xlane.f32.xlu0 %v306
          %v345 = vpop.xlane.xlu0 %344
          %346 = vadd.xlane.f32.xlu0 %v307
          %v347 = vpop.xlane.xlu0 %346
          %348 = vadd.xlane.f32.xlu0 %v308
          %v349 = vpop.xlane.xlu0 %348
          %350 = vadd.xlane.f32.xlu0 %v309
          %v351 = vpop.xlane.xlu0 %350
          %352 = vadd.xlane.f32.xlu0 %v310
          %v353 = vpop.xlane.xlu0 %352
          %354 = vadd.xlane.f32.xlu0 %v311
          %v355 = vpop.xlane.xlu0 %354
          %356 = vadd.xlane.f32.xlu0 %v312
          %v357 = vpop.xlane.xlu0 %356
          %358 = vadd.xlane.f32.xlu0 %v313
          %v359 = vpop.xlane.xlu0 %358
          %360 = vadd.xlane.f32.xlu0 %v314
          %v361 = vpop.xlane.xlu0 %360
          %362 = vadd.xlane.f32.xlu0 %v315
          %v363 = vpop.xlane.xlu0 %362
          %364 = vadd.xlane.f32.xlu0 %v316
          %v365 = vpop.xlane.xlu0 %364
          %366 = vadd.xlane.f32.xlu0 %v317
          %v367 = vpop.xlane.xlu0 %366
          %368 = vadd.xlane.f32.xlu0 %v318
          %v369 = vpop.xlane.xlu0 %368
          %370 = vadd.xlane.f32.xlu0 %v319
          %v371 = vpop.xlane.xlu0 %370
          %372 = vadd.xlane.f32.xlu0 %v320
          %v373 = vpop.xlane.xlu0 %372
          %374 = vadd.xlane.f32.xlu0 %v321
          %v375 = vpop.xlane.xlu0 %374
          %376 = vadd.xlane.f32.xlu0 %v322
          %v377 = vpop.xlane.xlu0 %376
          %378 = vadd.xlane.f32.xlu0 %v323
          %v379 = vpop.xlane.xlu0 %378
          %380 = vadd.xlane.f32.xlu0 %v324
          %v381 = vpop.xlane.xlu0 %380
          %382 = vadd.xlane.f32.xlu0 %v325
          %v383 = vpop.xlane.xlu0 %382
          %384 = vadd.xlane.f32.xlu0 %v326
          %v385 = vpop.xlane.xlu0 %384
          %386 = vadd.xlane.f32.xlu0 %v327
          %v387 = vpop.xlane.xlu0 %386
          %388 = vadd.xlane.f32.xlu0 %v328
          %v389 = vpop.xlane.xlu0 %388
          %390 = vadd.xlane.f32.xlu0 %v329
          %v391 = vpop.xlane.xlu0 %390
          %392 = vadd.xlane.f32.xlu0 %v330
          %v393 = vpop.xlane.xlu0 %392
          %394 = vadd.xlane.f32.xlu0 %v331
          %v395 = vpop.xlane.xlu0 %394
          %v396 = vrcp.pop 128.0
          %v397 = vmul.f32 %v333, %v396
          %v398 = vmul.f32 %v335, %v396
          %v399 = vmul.f32 %v337, %v396
          %v400 = vmul.f32 %v339, %v396
          %v401 = vmul.f32 %v341, %v396
          %v402 = vmul.f32 %v343, %v396
          %v403 = vmul.f32 %v345, %v396
          %v404 = vmul.f32 %v347, %v396
          %v405 = vmul.f32 %v349, %v396
          %v406 = vmul.f32 %v351, %v396
          %v407 = vmul.f32 %v353, %v396
          %v408 = vmul.f32 %v355, %v396
          %v409 = vmul.f32 %v357, %v396
          %v410 = vmul.f32 %v359, %v396
          %v411 = vmul.f32 %v361, %v396
          %v412 = vmul.f32 %v363, %v396
          %v413 = vmul.f32 %v365, %v396
          %v414 = vmul.f32 %v367, %v396
          %v415 = vmul.f32 %v369, %v396
          %v416 = vmul.f32 %v371, %v396
          %v417 = vmul.f32 %v373, %v396
          %v418 = vmul.f32 %v375, %v396
          %v419 = vmul.f32 %v377, %v396
          %v420 = vmul.f32 %v379, %v396
          %v421 = vmul.f32 %v381, %v396
          %v422 = vmul.f32 %v383, %v396
          %v423 = vmul.f32 %v385, %v396
          %v424 = vmul.f32 %v387, %v396
          %v425 = vmul.f32 %v389, %v396
          %v426 = vmul.f32 %v391, %v396
          %v427 = vmul.f32 %v393, %v396
          %v428 = vmul.f32 %v395, %v396
          %v429 = vmul.f32 %v300, %v300
          %v430 = vmul.f32 %v301, %v301
          %v431 = vmul.f32 %v302, %v302
          %v432 = vmul.f32 %v303, %v303
          %v433 = vmul.f32 %v304, %v304
          %v434 = vmul.f32 %v305, %v305
          %v435 = vmul.f32 %v306, %v306
          %v436 = vmul.f32 %v307, %v307
          %v437 = vmul.f32 %v308, %v308
          %v438 = vmul.f32 %v309, %v309
          %v439 = vmul.f32 %v310, %v310
          %v440 = vmul.f32 %v311, %v311
          %v441 = vmul.f32 %v312, %v312
          %v442 = vmul.f32 %v313, %v313
          %v443 = vmul.f32 %v314, %v314
          %v444 = vmul.f32 %v315, %v315
          %v445 = vmul.f32 %v316, %v316
          %v446 = vmul.f32 %v317, %v317
          %v447 = vmul.f32 %v318, %v318
          %v448 = vmul.f32 %v319, %v319
          %v449 = vmul.f32 %v320, %v320
          %v450 = vmul.f32 %v321, %v321
          %v451 = vmul.f32 %v322, %v322
          %v452 = vmul.f32 %v323, %v323
          %v453 = vmul.f32 %v324, %v324
          %v454 = vmul.f32 %v325, %v325
          %v455 = vmul.f32 %v326, %v326
          %v456 = vmul.f32 %v327, %v327
          %v457 = vmul.f32 %v328, %v328
          %v458 = vmul.f32 %v329, %v329
          %v459 = vmul.f32 %v330, %v330
          %v460 = vmul.f32 %v331, %v331
          %461 = vadd.xlane.f32.xlu0 %v429
          %v462 = vpop.xlane.xlu0 %461
          %463 = vadd.xlane.f32.xlu0 %v430
          %v464 = vpop.xlane.xlu0 %463
          %465 = vadd.xlane.f32.xlu0 %v431
          %v466 = vpop.xlane.xlu0 %465
          %467 = vadd.xlane.f32.xlu0 %v432
          %v468 = vpop.xlane.xlu0 %467
          %469 = vadd.xlane.f32.xlu0 %v433
          %v470 = vpop.xlane.xlu0 %469
          %471 = vadd.xlane.f32.xlu0 %v434
          %v472 = vpop.xlane.xlu0 %471
          %473 = vadd.xlane.f32.xlu0 %v435
          %v474 = vpop.xlane.xlu0 %473
          %475 = vadd.xlane.f32.xlu0 %v436
          %v476 = vpop.xlane.xlu0 %475
          %477 = vadd.xlane.f32.xlu0 %v437
          %v478 = vpop.xlane.xlu0 %477
          %479 = vadd.xlane.f32.xlu0 %v438
          %v480 = vpop.xlane.xlu0 %479
          %481 = vadd.xlane.f32.xlu0 %v439
          %v482 = vpop.xlane.xlu0 %481
          %483 = vadd.xlane.f32.xlu0 %v440
          %v484 = vpop.xlane.xlu0 %483
          %485 = vadd.xlane.f32.xlu0 %v441
          %v486 = vpop.xlane.xlu0 %485
          %487 = vadd.xlane.f32.xlu0 %v442
          %v488 = vpop.xlane.xlu0 %487
          %489 = vadd.xlane.f32.xlu0 %v443
          %v490 = vpop.xlane.xlu0 %489
          %491 = vadd.xlane.f32.xlu0 %v444
          %v492 = vpop.xlane.xlu0 %491
          %493 = vadd.xlane.f32.xlu0 %v445
          %v494 = vpop.xlane.xlu0 %493
          %495 = vadd.xlane.f32.xlu0 %v446
          %v496 = vpop.xlane.xlu0 %495
          %497 = vadd.xlane.f32.xlu0 %v447
          %v498 = vpop.xlane.xlu0 %497
          %499 = vadd.xlane.f32.xlu0 %v448
          %v500 = vpop.xlane.xlu0 %499
          %501 = vadd.xlane.f32.xlu0 %v449
          %v502 = vpop.xlane.xlu0 %501
          %503 = vadd.xlane.f32.xlu0 %v450
          %v504 = vpop.xlane.xlu0 %503
          %505 = vadd.xlane.f32.xlu0 %v451
          %v506 = vpop.xlane.xlu0 %505
          %507 = vadd.xlane.f32.xlu0 %v452
          %v508 = vpop.xlane.xlu0 %507
          %509 = vadd.xlane.f32.xlu0 %v453
          %v510 = vpop.xlane.xlu0 %509
          %511 = vadd.xlane.f32.xlu0 %v454
          %v512 = vpop.xlane.xlu0 %511
          %513 = vadd.xlane.f32.xlu0 %v455
          %v514 = vpop.xlane.xlu0 %513
          %515 = vadd.xlane.f32.xlu0 %v456
          %v516 = vpop.xlane.xlu0 %515
          %517 = vadd.xlane.f32.xlu0 %v457
          %v518 = vpop.xlane.xlu0 %517
          %519 = vadd.xlane.f32.xlu0 %v458
          %v520 = vpop.xlane.xlu0 %519
          %521 = vadd.xlane.f32.xlu0 %v459
          %v522 = vpop.xlane.xlu0 %521
          %523 = vadd.xlane.f32.xlu0 %v460
          %v524 = vpop.xlane.xlu0 %523
          %v525 = vmul.f32 %v462, %v396
          %v526 = vmul.f32 %v464, %v396
          %v527 = vmul.f32 %v466, %v396
          %v528 = vmul.f32 %v468, %v396
          %v529 = vmul.f32 %v470, %v396
          %v530 = vmul.f32 %v472, %v396
          %v531 = vmul.f32 %v474, %v396
          %v532 = vmul.f32 %v476, %v396
          %v533 = vmul.f32 %v478, %v396
          %v534 = vmul.f32 %v480, %v396
          %v535 = vmul.f32 %v482, %v396
          %v536 = vmul.f32 %v484, %v396
          %v537 = vmul.f32 %v486, %v396
          %v538 = vmul.f32 %v488, %v396
          %v539 = vmul.f32 %v490, %v396
          %v540 = vmul.f32 %v492, %v396
          %v541 = vmul.f32 %v494, %v396
          %v542 = vmul.f32 %v496, %v396
          %v543 = vmul.f32 %v498, %v396
          %v544 = vmul.f32 %v500, %v396
          %v545 = vmul.f32 %v502, %v396
          %v546 = vmul.f32 %v504, %v396
          %v547 = vmul.f32 %v506, %v396
          %v548 = vmul.f32 %v508, %v396
          %v549 = vmul.f32 %v510, %v396
          %v550 = vmul.f32 %v512, %v396
          %v551 = vmul.f32 %v514, %v396
          %v552 = vmul.f32 %v516, %v396
          %v553 = vmul.f32 %v518, %v396
          %v554 = vmul.f32 %v520, %v396
          %v555 = vmul.f32 %v522, %v396
          %v556 = vmul.f32 %v524, %v396
          %v557 = vmul.f32 %v397, %v397
          %v558 = vmul.f32 %v398, %v398
          %v559 = vmul.f32 %v399, %v399
          %v560 = vmul.f32 %v400, %v400
          %v561 = vmul.f32 %v401, %v401
          %v562 = vmul.f32 %v402, %v402
          %v563 = vmul.f32 %v403, %v403
          %v564 = vmul.f32 %v404, %v404
          %v565 = vmul.f32 %v405, %v405
          %v566 = vmul.f32 %v406, %v406
          %v567 = vmul.f32 %v407, %v407
          %v568 = vmul.f32 %v408, %v408
          %v569 = vmul.f32 %v409, %v409
          %v570 = vmul.f32 %v410, %v410
          %v571 = vmul.f32 %v411, %v411
          %v572 = vmul.f32 %v412, %v412
          %v573 = vmul.f32 %v413, %v413
          %v574 = vmul.f32 %v414, %v414
          %v575 = vmul.f32 %v415, %v415
          %v576 = vmul.f32 %v416, %v416
          %v577 = vmul.f32 %v417, %v417
          %v578 = vmul.f32 %v418, %v418
          %v579 = vmul.f32 %v419, %v419
          %v580 = vmul.f32 %v420, %v420
          %v581 = vmul.f32 %v421, %v421
          %v582 = vmul.f32 %v422, %v422
          %v583 = vmul.f32 %v423, %v423
          %v584 = vmul.f32 %v424, %v424
          %v585 = vmul.f32 %v425, %v425
          %v586 = vmul.f32 %v426, %v426
          %v587 = vmul.f32 %v427, %v427
          %v588 = vmul.f32 %v428, %v428
          %v589 = vsub.f32 %v525, %v557
          %v590 = vsub.f32 %v526, %v558
          %v591 = vsub.f32 %v527, %v559
          %v592 = vsub.f32 %v528, %v560
          %v593 = vsub.f32 %v529, %v561
          %v594 = vsub.f32 %v530, %v562
          %v595 = vsub.f32 %v531, %v563
          %v596 = vsub.f32 %v532, %v564
          %v597 = vsub.f32 %v533, %v565
          %v598 = vsub.f32 %v534, %v566
          %v599 = vsub.f32 %v535, %v567
          %v600 = vsub.f32 %v536, %v568
          %v601 = vsub.f32 %v537, %v569
          %v602 = vsub.f32 %v538, %v570
          %v603 = vsub.f32 %v539, %v571
          %v604 = vsub.f32 %v540, %v572
          %v605 = vsub.f32 %v541, %v573
          %v606 = vsub.f32 %v542, %v574
          %v607 = vsub.f32 %v543, %v575
          %v608 = vsub.f32 %v544, %v576
          %v609 = vsub.f32 %v545, %v577
          %v610 = vsub.f32 %v546, %v578
          %v611 = vsub.f32 %v547, %v579
          %v612 = vsub.f32 %v548, %v580
          %v613 = vsub.f32 %v549, %v581
          %v614 = vsub.f32 %v550, %v582
          %v615 = vsub.f32 %v551, %v583
          %v616 = vsub.f32 %v552, %v584
          %v617 = vsub.f32 %v553, %v585
          %v618 = vsub.f32 %v554, %v586
          %v619 = vsub.f32 %v555, %v587
          %v620 = vsub.f32 %v556, %v588
          %v621 = vmax.f32 %v589, 0.0
          %v622 = vmax.f32 %v590, 0.0
          %v623 = vmax.f32 %v591, 0.0
          %v624 = vmax.f32 %v592, 0.0
          %v625 = vmax.f32 %v593, 0.0
          %v626 = vmax.f32 %v594, 0.0
          %v627 = vmax.f32 %v595, 0.0
          %v628 = vmax.f32 %v596, 0.0
          %v629 = vmax.f32 %v597, 0.0
          %v630 = vmax.f32 %v598, 0.0
          %v631 = vmax.f32 %v599, 0.0
          %v632 = vmax.f32 %v600, 0.0
          %v633 = vmax.f32 %v601, 0.0
          %v634 = vmax.f32 %v602, 0.0
          %v635 = vmax.f32 %v603, 0.0
          %v636 = vmax.f32 %v604, 0.0
          %v637 = vmax.f32 %v605, 0.0
          %v638 = vmax.f32 %v606, 0.0
          %v639 = vmax.f32 %v607, 0.0
          %v640 = vmax.f32 %v608, 0.0
          %v641 = vmax.f32 %v609, 0.0
          %v642 = vmax.f32 %v610, 0.0
          %v643 = vmax.f32 %v611, 0.0
          %v644 = vmax.f32 %v612, 0.0
          %v645 = vmax.f32 %v613, 0.0
          %v646 = vmax.f32 %v614, 0.0
          %v647 = vmax.f32 %v615, 0.0
          %v648 = vmax.f32 %v616, 0.0
          %v649 = vmax.f32 %v617, 0.0
          %v650 = vmax.f32 %v618, 0.0
          %v651 = vmax.f32 %v619, 0.0
          %v652 = vmax.f32 %v620, 0.0
          %v653 = vadd.f32 %v621, 1e-05
          %v654 = vadd.f32 %v622, 1e-05
          %v655 = vadd.f32 %v623, 1e-05
          %v656 = vadd.f32 %v624, 1e-05
          %v657 = vadd.f32 %v625, 1e-05
          %v658 = vadd.f32 %v626, 1e-05
          %v659 = vadd.f32 %v627, 1e-05
          %v660 = vadd.f32 %v628, 1e-05
          %v661 = vadd.f32 %v629, 1e-05
          %v662 = vadd.f32 %v630, 1e-05
          %v663 = vadd.f32 %v631, 1e-05
          %v664 = vadd.f32 %v632, 1e-05
          %v665 = vadd.f32 %v633, 1e-05
          %v666 = vadd.f32 %v634, 1e-05
          %v667 = vadd.f32 %v635, 1e-05
          %v668 = vadd.f32 %v636, 1e-05
          %v669 = vadd.f32 %v637, 1e-05
          %v670 = vadd.f32 %v638, 1e-05
          %v671 = vadd.f32 %v639, 1e-05
          %v672 = vadd.f32 %v640, 1e-05
          %v673 = vadd.f32 %v641, 1e-05
          %v674 = vadd.f32 %v642, 1e-05
          %v675 = vadd.f32 %v643, 1e-05
          %v676 = vadd.f32 %v644, 1e-05
          %v677 = vadd.f32 %v645, 1e-05
          %v678 = vadd.f32 %v646, 1e-05
          %v679 = vadd.f32 %v647, 1e-05
          %v680 = vadd.f32 %v648, 1e-05
          %v681 = vadd.f32 %v649, 1e-05
          %v682 = vadd.f32 %v650, 1e-05
          %v683 = vadd.f32 %v651, 1e-05
          %v684 = vadd.f32 %v652, 1e-05
          %v685 = vrsqrt.pop %v653
          %v686 = vrsqrt.pop %v654
          %v687 = vrsqrt.pop %v655
          %v688 = vrsqrt.pop %v656
          %v689 = vrsqrt.pop %v657
          %v690 = vrsqrt.pop %v658
          %v691 = vrsqrt.pop %v659
          %v692 = vrsqrt.pop %v660
          %v693 = vrsqrt.pop %v661
          %v694 = vrsqrt.pop %v662
          %v695 = vrsqrt.pop %v663
          %v696 = vrsqrt.pop %v664
          %v697 = vrsqrt.pop %v665
          %v698 = vrsqrt.pop %v666
          %v699 = vrsqrt.pop %v667
          %v700 = vrsqrt.pop %v668
          %v701 = vrsqrt.pop %v669
          %v702 = vrsqrt.pop %v670
          %v703 = vrsqrt.pop %v671
          %v704 = vrsqrt.pop %v672
          %v705 = vrsqrt.pop %v673
          %v706 = vrsqrt.pop %v674
          %v707 = vrsqrt.pop %v675
          %v708 = vrsqrt.pop %v676
          %v709 = vrsqrt.pop %v677
          %v710 = vrsqrt.pop %v678
          %v711 = vrsqrt.pop %v679
          %v712 = vrsqrt.pop %v680
          %v713 = vrsqrt.pop %v681
          %v714 = vrsqrt.pop %v682
          %v715 = vrsqrt.pop %v683
          %v716 = vrsqrt.pop %v684
          %v717 = vsub.f32 %v300, %v397
          %v718 = vsub.f32 %v301, %v398
          %v719 = vsub.f32 %v302, %v399
          %v720 = vsub.f32 %v303, %v400
          %v721 = vsub.f32 %v304, %v401
          %v722 = vsub.f32 %v305, %v402
          %v723 = vsub.f32 %v306, %v403
          %v724 = vsub.f32 %v307, %v404
          %v725 = vsub.f32 %v308, %v405
          %v726 = vsub.f32 %v309, %v406
          %v727 = vsub.f32 %v310, %v407
          %v728 = vsub.f32 %v311, %v408
          %v729 = vsub.f32 %v312, %v409
          %v730 = vsub.f32 %v313, %v410
          %v731 = vsub.f32 %v314, %v411
          %v732 = vsub.f32 %v315, %v412
          %v733 = vsub.f32 %v316, %v413
          %v734 = vsub.f32 %v317, %v414
          %v735 = vsub.f32 %v318, %v415
          %v736 = vsub.f32 %v319, %v416
          %v737 = vsub.f32 %v320, %v417
          %v738 = vsub.f32 %v321, %v418
          %v739 = vsub.f32 %v322, %v419
          %v740 = vsub.f32 %v323, %v420
          %v741 = vsub.f32 %v324, %v421
          %v742 = vsub.f32 %v325, %v422
          %v743 = vsub.f32 %v326, %v423
          %v744 = vsub.f32 %v327, %v424
          %v745 = vsub.f32 %v328, %v425
          %v746 = vsub.f32 %v329, %v426
          %v747 = vsub.f32 %v330, %v427
          %v748 = vsub.f32 %v331, %v428
          %v749 = vmul.f32 %v717, %v685
          %v750 = vmul.f32 %v718, %v686
          %v751 = vmul.f32 %v719, %v687
          %v752 = vmul.f32 %v720, %v688
          %v753 = vmul.f32 %v721, %v689
          %v754 = vmul.f32 %v722, %v690
          %v755 = vmul.f32 %v723, %v691
          %v756 = vmul.f32 %v724, %v692
          %v757 = vmul.f32 %v725, %v693
          %v758 = vmul.f32 %v726, %v694
          %v759 = vmul.f32 %v727, %v695
          %v760 = vmul.f32 %v728, %v696
          %v761 = vmul.f32 %v729, %v697
          %v762 = vmul.f32 %v730, %v698
          %v763 = vmul.f32 %v731, %v699
          %v764 = vmul.f32 %v732, %v700
          %v765 = vmul.f32 %v733, %v701
          %v766 = vmul.f32 %v734, %v702
          %v767 = vmul.f32 %v735, %v703
          %v768 = vmul.f32 %v736, %v704
          %v769 = vmul.f32 %v737, %v705
          %v770 = vmul.f32 %v738, %v706
          %v771 = vmul.f32 %v739, %v707
          %v772 = vmul.f32 %v740, %v708
          %v773 = vmul.f32 %v741, %v709
          %v774 = vmul.f32 %v742, %v710
          %v775 = vmul.f32 %v743, %v711
          %v776 = vmul.f32 %v744, %v712
          %v777 = vmul.f32 %v745, %v713
          %v778 = vmul.f32 %v746, %v714
          %v779 = vmul.f32 %v747, %v715
          %v780 = vmul.f32 %v748, %v716
          %v781 = vld [vmem:[%s1] sm:$0x1]
          %v783 = vlaneseq
          %v784 = vshrl.u32 %v783, 7
          %v785 = vsub.s32 0, %v784
          %v786 = vrot.slane %v781, %v785
          %v788 = vmul.f32 %v749, %v786
          %v789 = vmul.f32 %v750, %v786
          %v790 = vmul.f32 %v751, %v786
          %v791 = vmul.f32 %v752, %v786
          %v792 = vmul.f32 %v753, %v786
          %v793 = vmul.f32 %v754, %v786
          %v794 = vmul.f32 %v755, %v786
          %v795 = vmul.f32 %v756, %v786
          %v796 = vmul.f32 %v757, %v786
          %v797 = vmul.f32 %v758, %v786
          %v798 = vmul.f32 %v759, %v786
          %v799 = vmul.f32 %v760, %v786
          %v800 = vmul.f32 %v761, %v786
          %v801 = vmul.f32 %v762, %v786
          %v802 = vmul.f32 %v763, %v786
          %v803 = vmul.f32 %v764, %v786
          %v804 = vmul.f32 %v765, %v786
          %v805 = vmul.f32 %v766, %v786
          %v806 = vmul.f32 %v767, %v786
          %v807 = vmul.f32 %v768, %v786
          %v808 = vmul.f32 %v769, %v786
          %v809 = vmul.f32 %v770, %v786
          %v810 = vmul.f32 %v771, %v786
          %v811 = vmul.f32 %v772, %v786
          %v812 = vmul.f32 %v773, %v786
          %v813 = vmul.f32 %v774, %v786
          %v814 = vmul.f32 %v775, %v786
          %v815 = vmul.f32 %v776, %v786
          %v816 = vmul.f32 %v777, %v786
          %v817 = vmul.f32 %v778, %v786
          %v818 = vmul.f32 %v779, %v786
          %v819 = vmul.f32 %v780, %v786
          %v820 = vld [vmem:[%s2] sm:$0x1]
          %v822 = vlaneseq
          %v823 = vshrl.u32 %v822, 7
          %v824 = vsub.s32 0, %v823
          %v825 = vrot.slane %v820, %v824
          %v827 = vadd.f32 %v788, %v825
          %v828 = vadd.f32 %v789, %v825
          %v829 = vadd.f32 %v790, %v825
          %v830 = vadd.f32 %v791, %v825
          %v831 = vadd.f32 %v792, %v825
          %v832 = vadd.f32 %v793, %v825
          %v833 = vadd.f32 %v794, %v825
          %v834 = vadd.f32 %v795, %v825
          %v835 = vadd.f32 %v796, %v825
          %v836 = vadd.f32 %v797, %v825
          %v837 = vadd.f32 %v798, %v825
          %v838 = vadd.f32 %v799, %v825
          %v839 = vadd.f32 %v800, %v825
          %v840 = vadd.f32 %v801, %v825
          %v841 = vadd.f32 %v802, %v825
          %v842 = vadd.f32 %v803, %v825
          %v843 = vadd.f32 %v804, %v825
          %v844 = vadd.f32 %v805, %v825
          %v845 = vadd.f32 %v806, %v825
          %v846 = vadd.f32 %v807, %v825
          %v847 = vadd.f32 %v808, %v825
          %v848 = vadd.f32 %v809, %v825
          %v849 = vadd.f32 %v810, %v825
          %v850 = vadd.f32 %v811, %v825
          %v851 = vadd.f32 %v812, %v825
          %v852 = vadd.f32 %v813, %v825
          %v853 = vadd.f32 %v814, %v825
          %v854 = vadd.f32 %v815, %v825
          %v855 = vadd.f32 %v816, %v825
          %v856 = vadd.f32 %v817, %v825
          %v857 = vadd.f32 %v818, %v825
          %v858 = vadd.f32 %v819, %v825
          %v859 = vpack.c.bf16 %v828, %v827
          %v860 = vpack.c.bf16 %v830, %v829
          %v861 = vpack.c.bf16 %v832, %v831
          %v862 = vpack.c.bf16 %v834, %v833
          %v863 = vpack.c.bf16 %v836, %v835
          %v864 = vpack.c.bf16 %v838, %v837
          %v865 = vpack.c.bf16 %v840, %v839
          %v866 = vpack.c.bf16 %v842, %v841
          %v867 = vpack.c.bf16 %v844, %v843
          %v868 = vpack.c.bf16 %v846, %v845
          %v869 = vpack.c.bf16 %v848, %v847
          %v870 = vpack.c.bf16 %v850, %v849
          %v871 = vpack.c.bf16 %v852, %v851
          %v872 = vpack.c.bf16 %v854, %v853
          %v873 = vpack.c.bf16 %v856, %v855
          %v874 = vpack.c.bf16 %v858, %v857
          %875 = vst [vmem:[#allocation2] sm:$0xff] %v859
          %876 = vst [vmem:[#allocation2 + $0x8] sm:$0xff] %v860
          %877 = vst [vmem:[#allocation2 + $0x10] sm:$0xff] %v861
          %878 = vst [vmem:[#allocation2 + $0x18] sm:$0xff] %v862
          %879 = vst [vmem:[#allocation2 + $0x20] sm:$0xff] %v863
          %880 = vst [vmem:[#allocation2 + $0x28] sm:$0xff] %v864
          %881 = vst [vmem:[#allocation2 + $0x30] sm:$0xff] %v865
          %882 = vst [vmem:[#allocation2 + $0x38] sm:$0xff] %v866
          %883 = vst [vmem:[#allocation2 + $0x40] sm:$0xff] %v867
          %884 = vst [vmem:[#allocation2 + $0x48] sm:$0xff] %v868
          %885 = vst [vmem:[#allocation2 + $0x50] sm:$0xff] %v869
          %886 = vst [vmem:[#allocation2 + $0x58] sm:$0xff] %v870
          %887 = vst [vmem:[#allocation2 + $0x60] sm:$0xff] %v871
          %888 = vst [vmem:[#allocation2 + $0x68] sm:$0xff] %v872
          %889 = vst [vmem:[#allocation2 + $0x70] sm:$0xff] %v873
          %890 = vst [vmem:[#allocation2 + $0x78] sm:$0xff] %v874
        $region52: #{tpu_custom_call.1} parent=39 // pred_fallthru
          _
        %v891 = vld [vmem:[#allocation2] sm:$0xff]
        %v892 = vld [vmem:[#allocation2 + $0x8] sm:$0xff]
        %v893 = vld [vmem:[#allocation2 + $0x10] sm:$0xff]
        %v894 = vld [vmem:[#allocation2 + $0x18] sm:$0xff]
        %v895 = vld [vmem:[#allocation2 + $0x20] sm:$0xff]
        %v896 = vld [vmem:[#allocation2 + $0x28] sm:$0xff]
        %v897 = vld [vmem:[#allocation2 + $0x30] sm:$0xff]
        %v898 = vld [vmem:[#allocation2 + $0x38] sm:$0xff]
        %v899 = vld [vmem:[#allocation2 + $0x40] sm:$0xff]
        %v900 = vld [vmem:[#allocation2 + $0x48] sm:$0xff]
        %v901 = vld [vmem:[#allocation2 + $0x50] sm:$0xff]
        %v902 = vld [vmem:[#allocation2 + $0x58] sm:$0xff]
        %v903 = vld [vmem:[#allocation2 + $0x60] sm:$0xff]
        %v904 = vld [vmem:[#allocation2 + $0x68] sm:$0xff]
        %v905 = vld [vmem:[#allocation2 + $0x70] sm:$0xff]
        %v906 = vld [vmem:[#allocation2 + $0x78] sm:$0xff]
        %v907 = vld [vmem:[#allocation6] sm:$0xf]
        %v908 = vld [vmem:[#allocation6 + $0x4] sm:$0xf]
        %v909 = vld [vmem:[#allocation6 + $0x8] sm:$0xf]
        %v910 = vld [vmem:[#allocation6 + $0xc] sm:$0xf]
        %v911 = vld [vmem:[#allocation6 + $0x10] sm:$0xf]
        %v912 = vld [vmem:[#allocation6 + $0x14] sm:$0xf]
        %v913 = vld [vmem:[#allocation6 + $0x18] sm:$0xf]
        %v914 = vld [vmem:[#allocation6 + $0x1c] sm:$0xf]
        %v915 = vld [vmem:[#allocation6 + $0x20] sm:$0xf]
        %v916 = vld [vmem:[#allocation6 + $0x24] sm:$0xf]
        %v917 = vld [vmem:[#allocation6 + $0x28] sm:$0xf]
        %v918 = vld [vmem:[#allocation6 + $0x2c] sm:$0xf]
        %v919 = vld [vmem:[#allocation6 + $0x30] sm:$0xf]
        %v920 = vld [vmem:[#allocation6 + $0x34] sm:$0xf]
        %v921 = vld [vmem:[#allocation6 + $0x38] sm:$0xf]
        %v922 = vld [vmem:[#allocation6 + $0x3c] sm:$0xf]
        %v923 = vld [vmem:[%s293] sm:$0x1]
        %v925 = vlaneseq
        %v926 = vshrl.u32 %v925, 7
        %v927 = vsub.s32 0, %v926
        %v928 = vrot.slane %v923, %v927
        %v946 = vunpack.c.l.b16 %v907
        %v947 = vunpack.c.l.b16 %v908
        %v948 = vunpack.c.l.b16 %v909
        %v949 = vunpack.c.l.b16 %v910
        %v950 = vunpack.c.l.b16 %v911
        %v951 = vunpack.c.l.b16 %v912
        %v952 = vunpack.c.l.b16 %v913
        %v953 = vunpack.c.l.b16 %v914
        %v954 = vunpack.c.l.b16 %v915
        %v955 = vunpack.c.l.b16 %v916
        %v956 = vunpack.c.l.b16 %v917
        %v957 = vunpack.c.l.b16 %v918
        %v958 = vunpack.c.l.b16 %v919
        %v959 = vunpack.c.l.b16 %v920
        %v960 = vunpack.c.l.b16 %v921
        %v961 = vunpack.c.l.b16 %v922
        %v962 = vpack.c.b16 %v947, %v946
        %v963 = vpack.c.b16 %v949, %v948
        %v964 = vpack.c.b16 %v951, %v950
        %v965 = vpack.c.b16 %v953, %v952
        %v966 = vpack.c.b16 %v955, %v954
        %v967 = vpack.c.b16 %v957, %v956
        %v968 = vpack.c.b16 %v959, %v958
        %v969 = vpack.c.b16 %v961, %v960
        %978 = vmatprep.subr.bf16.mxu0 0
        %979 = vmatpush1.bf16.msra.mxu0 %v962
        %980 = vmatprep.subr.bf16.mxu0 0
        %981 = vmatpush1.bf16.msra.mxu0 %v963
        %982 = vmatprep.subr.bf16.mxu0 0
        %983 = vmatpush1.bf16.msra.mxu0 %v964
        %984 = vmatprep.subr.bf16.mxu0 0
        %985 = vmatpush1.bf16.msra.mxu0 %v965
        %986 = vmatprep.subr.bf16.mxu0 0
        %987 = vmatpush1.bf16.msra.mxu0 %v966
        %988 = vmatprep.subr.bf16.mxu0 0
        %989 = vmatpush1.bf16.msra.mxu0 %v967
        %990 = vmatprep.subr.bf16.mxu0 0
        %991 = vmatpush1.bf16.msra.mxu0 %v968
        %992 = vmatprep.subr.bf16.mxu0 0
        %993 = vmatpush1.bf16.msra.mxu0 %v969
        %994 = vmatprep.subr.bf16.mxu0 0
        %995 = vmatpush1.bf16.msra.mxu0 0
        %996 = vmatprep.subr.bf16.mxu0 0
        %997 = vmatpush1.bf16.msra.mxu0 0
        %998 = vmatprep.subr.bf16.mxu0 0
        %999 = vmatpush1.bf16.msra.mxu0 0
        %1000 = vmatprep.subr.bf16.mxu0 0
        %1001 = vmatpush1.bf16.msra.mxu0 0
        %1002 = vmatprep.subr.bf16.mxu0 0
        %1003 = vmatpush1.bf16.msra.mxu0 0
        %1004 = vmatprep.subr.bf16.mxu0 0
        %1005 = vmatpush1.bf16.msra.mxu0 0
        %1006 = vmatprep.subr.bf16.mxu0 0
        %1007 = vmatpush1.bf16.msra.mxu0 0
        %1008 = vmatprep.subr.bf16.mxu0 0
        %1009 = vmatpush1.bf16.msra.mxu0 0
        %1010 = vmatprep.mubr.bf16.mxu0 0
        %1011 = vmatmul.mubr.bf16.gmra.mrb[0].mxu0 %v891
        %v1012 = vpop.f32.mrb[0].mxu0
        %v1013 = vadd.f32 %v928, %v1012
        %v1014 = vpop.f32.mrb[0].mxu0
        %v1015 = vpop.f32.mrb[0].mxu0
        %v1016 = vadd.f32 %v928, %v1015
        %v1017 = vpop.f32.mrb[0].mxu0
        %1018 = vmatprep.mubr.bf16.mxu0 0
        %1019 = vmatmul.mubr.bf16.gmra.mrb[0].mxu0 %v892
        %v1020 = vpop.f32.mrb[0].mxu0
        %v1021 = vadd.f32 %v928, %v1020
        %v1022 = vpop.f32.mrb[0].mxu0
        %v1023 = vpop.f32.mrb[0].mxu0
        %v1024 = vadd.f32 %v928, %v1023
        %v1025 = vpop.f32.mrb[0].mxu0
        %1026 = vmatprep.mubr.bf16.mxu0 0
        %1027 = vmatmul.mubr.bf16.gmra.mrb[0].mxu0 %v893
        %v1028 = vpop.f32.mrb[0].mxu0
        %v1029 = vadd.f32 %v928, %v1028
        %v1030 = vpop.f32.mrb[0].mxu0
        %v1031 = vpop.f32.mrb[0].mxu0
        %v1032 = vadd.f32 %v928, %v1031
        %v1033 = vpop.f32.mrb[0].mxu0
        %1034 = vmatprep.mubr.bf16.mxu0 0
        %1035 = vmatmul.mubr.bf16.gmra.mrb[0].mxu0 %v894
        %v1036 = vpop.f32.mrb[0].mxu0
        %v1037 = vadd.f32 %v928, %v1036
        %v1038 = vpop.f32.mrb[0].mxu0
        %v1039 = vpop.f32.mrb[0].mxu0
        %v1040 = vadd.f32 %v928, %v1039
        %v1041 = vpop.f32.mrb[0].mxu0
        %1042 = vmatprep.mubr.bf16.mxu0 0
        %1043 = vmatmul.mubr.bf16.gmra.mrb[0].mxu0 %v895
        %v1044 = vpop.f32.mrb[0].mxu0
        %v1045 = vadd.f32 %v928, %v1044
        %v1046 = vpop.f32.mrb[0].mxu0
        %v1047 = vpop.f32.mrb[0].mxu0
        %v1048 = vadd.f32 %v928, %v1047
        %v1049 = vpop.f32.mrb[0].mxu0
        %1050 = vmatprep.mubr.bf16.mxu0 0
        %1051 = vmatmul.mubr.bf16.gmra.mrb[0].mxu0 %v896
        %v1052 = vpop.f32.mrb[0].mxu0
        %v1053 = vadd.f32 %v928, %v1052
        %v1054 = vpop.f32.mrb[0].mxu0
        %v1055 = vpop.f32.mrb[0].mxu0
        %v1056 = vadd.f32 %v928, %v1055
        %v1057 = vpop.f32.mrb[0].mxu0
        %1058 = vmatprep.mubr.bf16.mxu0 0
        %1059 = vmatmul.mubr.bf16.gmra.mrb[0].mxu0 %v897
        %v1060 = vpop.f32.mrb[0].mxu0
        %v1061 = vadd.f32 %v928, %v1060
        %v1062 = vpop.f32.mrb[0].mxu0
        %v1063 = vpop.f32.mrb[0].mxu0
        %v1064 = vadd.f32 %v928, %v1063
        %v1065 = vpop.f32.mrb[0].mxu0
        %1066 = vmatprep.mubr.bf16.mxu0 0
        %1067 = vmatmul.mubr.bf16.gmra.mrb[0].mxu0 %v898
        %v1068 = vpop.f32.mrb[0].mxu0
        %v1069 = vadd.f32 %v928, %v1068
        %v1070 = vpop.f32.mrb[0].mxu0
        %v1071 = vpop.f32.mrb[0].mxu0
        %v1072 = vadd.f32 %v928, %v1071
        %v1073 = vpop.f32.mrb[0].mxu0
        %1074 = vmatprep.mubr.bf16.mxu0 0
        %1075 = vmatmul.mubr.bf16.gmra.mrb[0].mxu0 %v899
        %v1076 = vpop.f32.mrb[0].mxu0
        %v1077 = vadd.f32 %v928, %v1076
        %v1078 = vpop.f32.mrb[0].mxu0
        %v1079 = vpop.f32.mrb[0].mxu0
        %v1080 = vadd.f32 %v928, %v1079
        %v1081 = vpop.f32.mrb[0].mxu0
        %1082 = vmatprep.mubr.bf16.mxu0 0
        %1083 = vmatmul.mubr.bf16.gmra.mrb[0].mxu0 %v900
        %v1084 = vpop.f32.mrb[0].mxu0
        %v1085 = vadd.f32 %v928, %v1084
        %v1086 = vpop.f32.mrb[0].mxu0
        %v1087 = vpop.f32.mrb[0].mxu0
        %v1088 = vadd.f32 %v928, %v1087
        %v1089 = vpop.f32.mrb[0].mxu0
        %1090 = vmatprep.mubr.bf16.mxu0 0
        %1091 = vmatmul.mubr.bf16.gmra.mrb[0].mxu0 %v901
        %v1092 = vpop.f32.mrb[0].mxu0
        %v1093 = vadd.f32 %v928, %v1092
        %v1094 = vpop.f32.mrb[0].mxu0
        %v1095 = vpop.f32.mrb[0].mxu0
        %v1096 = vadd.f32 %v928, %v1095
        %v1097 = vpop.f32.mrb[0].mxu0
        %1098 = vmatprep.mubr.bf16.mxu0 0
        %1099 = vmatmul.mubr.bf16.gmra.mrb[0].mxu0 %v902
        %v1100 = vpop.f32.mrb[0].mxu0
        %v1101 = vadd.f32 %v928, %v1100
        %v1102 = vpop.f32.mrb[0].mxu0
        %v1103 = vpop.f32.mrb[0].mxu0
        %v1104 = vadd.f32 %v928, %v1103
        %v1105 = vpop.f32.mrb[0].mxu0
        %1106 = vmatprep.mubr.bf16.mxu0 0
        %1107 = vmatmul.mubr.bf16.gmra.mrb[0].mxu0 %v903
        %v1108 = vpop.f32.mrb[0].mxu0
        %v1109 = vadd.f32 %v928, %v1108
        %v1110 = vpop.f32.mrb[0].mxu0
        %v1111 = vpop.f32.mrb[0].mxu0
        %v1112 = vadd.f32 %v928, %v1111
        %v1113 = vpop.f32.mrb[0].mxu0
        %1114 = vmatprep.mubr.bf16.mxu0 0
        %1115 = vmatmul.mubr.bf16.gmra.mrb[0].mxu0 %v904
        %v1116 = vpop.f32.mrb[0].mxu0
        %v1117 = vadd.f32 %v928, %v1116
        %v1118 = vpop.f32.mrb[0].mxu0
        %v1119 = vpop.f32.mrb[0].mxu0
        %v1120 = vadd.f32 %v928, %v1119
        %v1121 = vpop.f32.mrb[0].mxu0
        %1122 = vmatprep.mubr.bf16.mxu0 0
        %1123 = vmatmul.mubr.bf16.gmra.mrb[0].mxu0 %v905
        %v1124 = vpop.f32.mrb[0].mxu0
        %v1125 = vadd.f32 %v928, %v1124
        %v1126 = vpop.f32.mrb[0].mxu0
        %v1127 = vpop.f32.mrb[0].mxu0
        %v1128 = vadd.f32 %v928, %v1127
        %v1129 = vpop.f32.mrb[0].mxu0
        %1130 = vmatprep.mubr.bf16.mxu0 0
        %1131 = vmatmul.mubr.bf16.gmra.mrb[0].mxu0 %v906
        %v1132 = vpop.f32.mrb[0].mxu0
        %v1133 = vadd.f32 %v928, %v1132
        %v1134 = vpop.f32.mrb[0].mxu0
        %v1135 = vpop.f32.mrb[0].mxu0
        %v1136 = vadd.f32 %v928, %v1135
        %v1137 = vpop.f32.mrb[0].mxu0
        %1138 = vdwg.mxu0
        %1139 = vst [vmem:[%s289] sm:$0xff] %v1013
        %1140 = vst [vmem:[%s289 + $0x8] sm:$0xff] %v1016
        %1141 = vst [vmem:[%s289 + $0x10] sm:$0xff] %v1021
        %1142 = vst [vmem:[%s289 + $0x18] sm:$0xff] %v1024
        %1143 = vst [vmem:[%s289 + $0x20] sm:$0xff] %v1029
        %1144 = vst [vmem:[%s289 + $0x28] sm:$0xff] %v1032
        %1145 = vst [vmem:[%s289 + $0x30] sm:$0xff] %v1037
        %1146 = vst [vmem:[%s289 + $0x38] sm:$0xff] %v1040
        %1147 = vst [vmem:[%s289 + $0x40] sm:$0xff] %v1045
        %1148 = vst [vmem:[%s289 + $0x48] sm:$0xff] %v1048
        %1149 = vst [vmem:[%s289 + $0x50] sm:$0xff] %v1053
        %1150 = vst [vmem:[%s289 + $0x58] sm:$0xff] %v1056
        %1151 = vst [vmem:[%s289 + $0x60] sm:$0xff] %v1061
        %1152 = vst [vmem:[%s289 + $0x68] sm:$0xff] %v1064
        %1153 = vst [vmem:[%s289 + $0x70] sm:$0xff] %v1069
        %1154 = vst [vmem:[%s289 + $0x78] sm:$0xff] %v1072
        %1155 = vst [vmem:[%s289 + $0x80] sm:$0xff] %v1077
        %1156 = vst [vmem:[%s289 + $0x88] sm:$0xff] %v1080
        %1157 = vst [vmem:[%s289 + $0x90] sm:$0xff] %v1085
        %1158 = vst [vmem:[%s289 + $0x98] sm:$0xff] %v1088
        %1159 = vst [vmem:[%s289 + $0xa0] sm:$0xff] %v1093
        %1160 = vst [vmem:[%s289 + $0xa8] sm:$0xff] %v1096
        %1161 = vst [vmem:[%s289 + $0xb0] sm:$0xff] %v1101
        %1162 = vst [vmem:[%s289 + $0xb8] sm:$0xff] %v1104
        %1163 = vst [vmem:[%s289 + $0xc0] sm:$0xff] %v1109
        %1164 = vst [vmem:[%s289 + $0xc8] sm:$0xff] %v1112
        %1165 = vst [vmem:[%s289 + $0xd0] sm:$0xff] %v1117
        %1166 = vst [vmem:[%s289 + $0xd8] sm:$0xff] %v1120
        %1167 = vst [vmem:[%s289 + $0xe0] sm:$0xff] %v1125
        %1168 = vst [vmem:[%s289 + $0xe8] sm:$0xff] %v1128
        %1169 = vst [vmem:[%s289 + $0xf0] sm:$0xff] %v1133
        %1170 = vst [vmem:[%s289 + $0xf8] sm:$0xff] %v1136
        %s1171 = sand.u32 %s165, 1
        %s1172 = scalar_lea.sflag [#allocation5], %s1171
        %s1173 = sand.u32 %s165, 1
        %s1174 = smul.addr %s1173, 256
        %s1175 = scalar_lea.vmem [#allocation8], %s1174
        // Predicated region
        $region53: #{tpu_custom_call.1} parent=39 // pred_check
          %p1176 = pneg %p175
        $region54: #{tpu_custom_call.1} parent=39 // pred_check_branch
          %1178 = sbr.rel (%p1176) target = $region56
        $region55: #{tpu_custom_call.1} parent=39 // pred_region
          %s1179 = smul.u32 32, %s27
          %s1181 = ssub.s32 4096, 4096
          %1182 = vsyncadd %s1172, %s1181
          %s1183 = sadd.s32 %s28, %s1179
          %s1184 = smul.addr %s1183, 128
          %s1185 = scalar_lea.hbm %s5, %s1184
          %s1186 = sshll.u32 %s1175, 4
          %s1187 = int_to_ptr.vmem [resolvable:$true] %s1186
          %1192 = dma.vmem_to_hbm [thread:$0]  %s1187, 4096, %s1185, %s1172, 128, 128, 8
        $region56: #{tpu_custom_call.1} parent=39 // pred_fallthru
          _
      $region40: #{tpu_custom_call.1} parent=5 // pred_fallthru
        _
      %p1193 = scmp.le.s32.totalorder 2, %s18
      // Predicated region
      $region57: #{tpu_custom_call.1} parent=5 // pred_check
        %p1194 = pneg %p1193
      $region58: #{tpu_custom_call.1} parent=5 // pred_check_branch
        %1196 = sbr.rel (%p1194) target = $region60
      $region59: #{tpu_custom_call.1} parent=5 // pred_region
        %s1197 = ssub.s32 %s18, 2
        // Predicated region
        $region61: #{tpu_custom_call.1} parent=59 // pred_check
          %p1198 = pneg %p181
        $region62: #{tpu_custom_call.1} parent=59 // pred_check_branch
          %1200 = sbr.rel (%p1198) target = $region64
        $region63: #{tpu_custom_call.1} parent=59 // pred_region
          %s1201 = sand.u32 %s166, 1
          %s1202 = scalar_lea.sflag [#allocation5], %s1201
          %s1203 = sand.u32 %s166, 1
          %s1204 = smul.addr %s1203, 256
          %s1205 = scalar_lea.vmem [#allocation8], %s1204
          %1206 = dma.done %s1202, 4096
        $region64: #{tpu_custom_call.1} parent=59 // pred_fallthru
          _
      $region60: #{tpu_custom_call.1} parent=5 // pred_fallthru
        _
    $region6: #{tpu_custom_call.1} parent=1 // loop_footer
      %s22 = sadd.s32 1, %s18
    $region7: #{tpu_custom_call.1} parent=1 // loop_footer_branch
      %17 = sbr.rel target = $region3
    $region8: #{tpu_custom_call.1} parent=1 // loop_exit
      _
    %1207 = vsyncpa [#allocation4], 1
    %s1208 = scalar_lea.sflag [#allocation4], 1
    %1209 = vsyncpa %s1208, 1
    %1210 = vsyncpa [#allocation7], 1
    %1211 = vsyncpa [#allocation5], 1
    %s1212 = scalar_lea.sflag [#allocation5], 1
    %1213 = vsyncpa %s1212, 1

</llo_original>
